<compile_context>
chip_gen: v5e
topology: v5e:2x2
jax: 0.10.0
libtpu: 0.0.40
codegen_flags: <defaults>
</compile_context>

<pallas_src>
import functools

import jax
import jax.numpy as jnp
from jax import lax
from jax.experimental import pallas as pl
from jax.experimental.pallas import tpu as pltpu

_MIB = 1024 * 1024


def _round_up(x, m):
    return ((x + m - 1) // m) * m


def _round_down_at_least(x, m):
    return max((x // m) * m, m)


def _vmem_capacity_bytes():
    """Physical VMEM per core at trace time; conservative fallback if unavailable."""
    try:
        info = pltpu.get_tpu_info()
        for attr in ("vmem_capacity_bytes", "vmem_bytes", "vmem_size_bytes"):
            v = getattr(info, attr, None)
            if v:
                return int(v)
    except Exception:
        pass
    return 64 * _MIB  # v7x-sized conservative default


def _pick_tiling(n, c, itemsize):
    """Returns (tile_n, rsub, num_tiles, vmem_limit_bytes)."""
    # Sublane packing: 8 rows for f32, 16 for bf16, 32 for int8/fp8.
    packing = 8 * max(1, 4 // itemsize)

    # Compute sub-chunk rows: keep ~one f32 (rsub, C) temporary around the size of
    # the vreg file so the per-chunk math (cast/exp/compare) does not spill to VMEM.
    rsub = min(512, max(packing, (128 * 1024) // max(4 * c, 1)))
    rsub = _round_down_at_least(rsub, packing)

    n_cap = _round_up(n, packing)        # smallest legal tile covering every row
    rsub = min(rsub, n_cap)

    # DMA tile: per-generation VMEM budget, accounting for 2x pipeline buffers and
    # the lane-padded (tile_n, 1) int32 label column (128 lanes * 4 B per row).
    capacity = _vmem_capacity_bytes()
    if capacity >= 96 * _MIB:            # v5e / v6e: 128 MiB physical VMEM
        per_buffer_budget = 20 * _MIB
        limit_cap = 64 * _MIB
    else:                                # v7x: 64 MiB physical VMEM per TensorCore
        per_buffer_budget = 10 * _MIB
        limit_cap = 44 * _MIB

    row_bytes = c * itemsize + 128 * 4   # logits row + lane-padded label row
    max_rows = max(per_buffer_budget // row_bytes, rsub)
    tile_n = max(rsub, _round_down_at_least(min(max_rows, n_cap), rsub))

    # v7x megacore: give the "parallel" grid axis at least 2 steps when possible
    # (harmless extra grid step on 1-TC v5e/v6e).
    if tile_n >= n and n > rsub:
        tile_n = max(rsub, _round_up(-(-n // 2), rsub))

    num_tiles = -(-n // tile_n)

    # Scoped-VMEM request: double-buffered inputs + chunk temporaries + slack.
    request = 2 * tile_n * row_bytes + 8 * rsub * c * 4 + 4 * _MIB
    vmem_limit = int(min(limit_cap, max(32 * _MIB, request)))
    return tile_n, rsub, num_tiles, vmem_limit


def _ce_loss_tile_kernel(pred_ref, label_ref, out_ref, *, c, rsub, n_chunks):
    """One batch tile: walk row sub-chunks, accumulate masked NLL partial sum."""

    def chunk_body(r, acc):
        start = pl.multiple_of(r * rsub, rsub) if n_chunks > 1 else 0
        x = pred_ref[pl.ds(start, rsub), :]           # (rsub, C), native dtype
        lbl = label_ref[pl.ds(start, rsub), :]        # (rsub, 1), int32 (-1 = padded row)

        # Row max and target-logit pick in the native dtype (packed bf16 vregs on
        # v6e/v7x); the pick is exact (single nonzero per row).
        row_max = jnp.max(x, axis=-1, keepdims=True)                      # (rsub, 1)
        class_ids = lax.broadcasted_iota(jnp.int32, (1, c), 1)            # (1, C)
        picked = jnp.sum(jnp.where(class_ids == lbl, x, 0),
                         axis=-1, keepdims=True)                          # (rsub, 1)

        # Numerically stable log-sum-exp and final subtraction in f32.
        row_max_f = row_max.astype(jnp.float32)
        shifted = x.astype(jnp.float32) - row_max_f                       # (rsub, C) f32
        sumexp = jnp.sum(jnp.exp(shifted), axis=-1, keepdims=True)        # (rsub, 1)
        lse = jnp.log(sumexp) + row_max_f
        loss = lse - picked.astype(jnp.float32)                           # (rsub, 1) f32

        # Padded rows (label == -1) contribute zero; valid labels are in [0, C).
        return acc + jnp.sum(jnp.where(lbl >= 0, loss, 0.0))

    tile_sum = lax.fori_loop(0, n_chunks, chunk_body, jnp.zeros((), jnp.float32),
                             unroll=(n_chunks <= 8))

    # Lane-dense (1, 128) partial-sum row; tiny final reduce + mean in the wrapper.
    out_ref[...] = jnp.full((1, 128), tile_sum, dtype=jnp.float32)


def cross_entropy_loss(pred, label):
    """pred: (N, C) float logits (native dtype); label: (N,) int class indices in [0, C)."""
    n, c = pred.shape
    itemsize = jnp.dtype(pred.dtype).itemsize
    tile_n, rsub, num_tiles, vmem_limit = _pick_tiling(n, c, itemsize)
    n_chunks = tile_n // rsub
    n_pad = num_tiles * tile_n

    # int32 label column, padded with -1 so padded tail rows (and the garbage logits
    # the partial last block reads) are masked inside the kernel.
    label_col = jnp.pad(label.astype(jnp.int32), (0, n_pad - n),
                        constant_values=-1).reshape(n_pad, 1)

    partials = pl.pallas_call(
        functools.partial(_ce_loss_tile_kernel, c=c, rsub=rsub, n_chunks=n_chunks),
        grid=(num_tiles,),
        out_shape=jax.ShapeDtypeStruct((num_tiles, 128), jnp.float32),
        in_specs=[
            pl.BlockSpec((tile_n, c), lambda i: (i, 0)),   # logits tile (native dtype)
            pl.BlockSpec((tile_n, 1), lambda i: (i, 0)),   # labels column (int32)
        ],
        out_specs=pl.BlockSpec((1, 128), lambda i: (i, 0)),
        compiler_params=pltpu.CompilerParams(
            dimension_semantics=("parallel",),             # megacore sharding on v7x
            vmem_limit_bytes=vmem_limit,
        ),
    )(pred, label_col)

    # Tiny final reduction + mean (CrossEntropyLoss default reduction).
    return jnp.sum(partials[:, 0]) / n


class CELossBasic:
    """JAX/Pallas counterpart of the PyTorch CELoss_basic module."""

    def __call__(self, pred, label):
        return cross_entropy_loss(pred, label)


if __name__ == "__main__":
    key = jax.random.PRNGKey(0)
    k_pred, k_label = jax.random.split(key)

    N, C = 8, 32  # small shapes consistent with CrossEntropyLoss((N, C), (N,))
    pred = jax.random.normal(k_pred, (N, C), dtype=jnp.float32)
    label = jax.random.randint(k_label, (N,), 0, C, dtype=jnp.int32)

    model = CELossBasic()
    loss = model(pred, label)
    jax.block_until_ready(loss)

    # Pure-JAX reference (same math as torch.nn.CrossEntropyLoss, mean reduction).
    log_probs = jax.nn.log_softmax(pred, axis=-1)
    ref = -jnp.mean(jnp.take_along_axis(log_probs, label[:, None], axis=-1))
    assert jnp.allclose(loss, ref, rtol=1e-5, atol=1e-5), (loss, ref)

    print("KERNEL_OK")
</pallas_src>

<mosaic_0001>
module attributes {stable_mosaic.version = 11 : i64} {
  func.func @_ce_loss_tile_kernel(%arg0: i32, %arg1: memref<8x32xf32, #tpu.memory_space<vmem>>, %arg2: memref<8x1xi32, #tpu.memory_space<vmem>>, %arg3: memref<1x128xf32, #tpu.memory_space<vmem>>) attributes {dimension_semantics = [#tpu.dimension_semantics<parallel>], iteration_bounds = array<i64: 1>, scalar_prefetch = 0 : i64, scratch_operands = 0 : i64, tpu.core_type = #tpu.core_type<tc>, window_params = [{transform_indices = @transform_0, window_bounds = array<i64: 8, 32>}, {transform_indices = @transform_1, window_bounds = array<i64: 8, 1>}, {transform_indices = @transform_2, window_bounds = array<i64: 1, 128>}]} {
    %cst = arith.constant 0.000000e+00 : f32
    %c0_i32 = arith.constant 0 : i32
    %c0 = arith.constant 0 : index
    %c0_0 = arith.constant 0 : index
    %0 = vector.load %arg1[%c0, %c0_0] : memref<8x32xf32, #tpu.memory_space<vmem>>, vector<8x32xf32>
    %c0_1 = arith.constant 0 : index
    %c0_2 = arith.constant 0 : index
    %1 = vector.load %arg2[%c0_1, %c0_2] : memref<8x1xi32, #tpu.memory_space<vmem>>, vector<8x1xi32>
    %cst_3 = arith.constant dense<0xFF800000> : vector<8xf32>
    %2 = vector.multi_reduction <maximumf>, %0, %cst_3 [1] : vector<8x32xf32> to vector<8xf32>
    %3 = vector.shape_cast %2 : vector<8xf32> to vector<8x1xf32>
    %4 = tpu.iota {dimensions = array<i32: 1>} : vector<1x32xi32>
    %5 = vector.broadcast %4 : vector<1x32xi32> to vector<8x32xi32>
    %6 = vector.broadcast %1 : vector<8x1xi32> to vector<8x32xi32>
    %7 = arith.cmpi eq, %5, %6 : vector<8x32xi32>
    %c0_i32_4 = arith.constant 0 : i32
    %8 = arith.sitofp %c0_i32_4 : i32 to f32
    %9 = vector.broadcast %8 : f32 to vector<8x32xf32>
    %10 = arith.select %7, %0, %9 : vector<8x32xi1>, vector<8x32xf32>
    %cst_5 = arith.constant dense<0.000000e+00> : vector<8xf32>
    %11 = vector.multi_reduction <add>, %10, %cst_5 [1] : vector<8x32xf32> to vector<8xf32>
    %12 = vector.shape_cast %11 : vector<8xf32> to vector<8x1xf32>
    %13 = vector.broadcast %3 : vector<8x1xf32> to vector<8x32xf32>
    %14 = arith.subf %0, %13 : vector<8x32xf32>
    %15 = math.exp %14 : vector<8x32xf32>
    %cst_6 = arith.constant dense<0.000000e+00> : vector<8xf32>
    %16 = vector.multi_reduction <add>, %15, %cst_6 [1] : vector<8x32xf32> to vector<8xf32>
    %17 = vector.shape_cast %16 : vector<8xf32> to vector<8x1xf32>
    %18 = math.log %17 : vector<8x1xf32>
    %19 = arith.addf %18, %3 : vector<8x1xf32>
    %20 = arith.subf %19, %12 : vector<8x1xf32>
    %c0_i32_7 = arith.constant 0 : i32
    %21 = vector.broadcast %c0_i32_7 : i32 to vector<8x1xi32>
    %22 = arith.cmpi sge, %1, %21 : vector<8x1xi32>
    %cst_8 = arith.constant 0.000000e+00 : f32
    %23 = vector.broadcast %cst_8 : f32 to vector<8x1xf32>
    %24 = arith.select %22, %20, %23 : vector<8x1xi1>, vector<8x1xf32>
    %25 = vector.shape_cast %24 : vector<8x1xf32> to vector<1x8x1xf32>
    %cst_9 = arith.constant dense<0.000000e+00> : vector<1xf32>
    %26 = vector.multi_reduction <add>, %25, %cst_9 [1, 2] : vector<1x8x1xf32> to vector<1xf32>
    %27 = vector.shape_cast %26 : vector<1xf32> to vector<1x1x1xf32>
    %28 = vector.extract %27[0, 0, 0] : f32 from vector<1x1x1xf32>
    %29 = arith.addf %cst, %28 : f32
    %30 = vector.broadcast %29 : f32 to vector<1x128xf32>
    %c0_10 = arith.constant 0 : index
    %c0_11 = arith.constant 0 : index
    %31 = vector.load %arg3[%c0_10, %c0_11] : memref<1x128xf32, #tpu.memory_space<vmem>>, vector<1x128xf32>
    tpu.vector_store %arg3[%c0_10, %c0_11], %30 {strides = array<i32>} : memref<1x128xf32, #tpu.memory_space<vmem>>, vector<1x128xf32>,
    return
  }
  func.func @transform_0(%arg0: i32) -> (i32, i32) {
    %c0_i32 = arith.constant 0 : i32
    %c0_i32_0 = arith.constant 0 : i32
    return %arg0, %c0_i32 : i32, i32
  }
  func.func @transform_1(%arg0: i32) -> (i32, i32) {
    %c0_i32 = arith.constant 0 : i32
    %c0_i32_0 = arith.constant 0 : i32
    return %arg0, %c0_i32 : i32, i32
  }
  func.func @transform_2(%arg0: i32) -> (i32, i32) {
    %c0_i32 = arith.constant 0 : i32
    %c0_i32_0 = arith.constant 0 : i32
    return %arg0, %c0_i32 : i32, i32
  }
}

</mosaic_0001>

<llo_original>
// kernel: tpu_custom_call.1
$region0: #{tpu_custom_call.1}
  #allocation0 [shape = 'u32[]', space=smem, size = 0x4, offset = 0x4, fixed_abs, tag = 'smem constant byte address 0x4 - core index']
  #allocation1 [shape = 'u32[72,128]{1,0:T(1,128)}', space=vmem, size = 0x9000, scoped, tag = 'internal scratch']
  %s0 = inlined_call_operand.vmem [shape: f32[8,32], index: 0, kind: input, shape index: {}]
  %s1 = inlined_call_operand.vmem [shape: s32[8,1], index: 1, kind: input, shape index: {}]
  %s2 = inlined_call_operand.hbm [shape: f32[1,128], index: 2, kind: output, shape index: {}]
  %s3 = sld [smem:[#allocation0]]
  $region18: #{tpu_custom_call.1} parent=0
    _
  %s5 = ssub.s32 1, %s3
  %s6 = scalar_select 0, %s5, %s3
  $region1: #{tpu_custom_call.1} parent=0
    #allocation2 [shape = 'u8[512]{0}', space=vmem, size = 0x400, scoped, tag = 'output window, operand 0, single buffered']
    #allocation3 [shape = 's32[1]{0}', space=sflag, size = 0x4, scoped, tag = 'scoped memory for tpu_custom_call.1']
    %7 = vsyncpa [#allocation3], 0
    // Predicated region
    $region2: #{tpu_custom_call.1} parent=1 // pred_check
      _
    $region3: #{tpu_custom_call.1} parent=1 // pred_check_branch
      %9 = sbr.rel (0) target = $region5
    $region4: #{tpu_custom_call.1} parent=1 // pred_region
      _
    $region5: #{tpu_custom_call.1} parent=1 // pred_fallthru
      _
    // Predicated region
    $region6: #{tpu_custom_call.1} parent=1 // pred_check
      _
    $region7: #{tpu_custom_call.1} parent=1 // pred_check_branch
      %11 = sbr.rel (0) target = $region9
    $region8: #{tpu_custom_call.1} parent=1 // pred_region
      _
    $region9: #{tpu_custom_call.1} parent=1 // pred_fallthru
      _
    %v12 = vld [vmem:[%s0] sm:$0xff]
    %v13 = vld [vmem:[%s1] sm:$0xff]
    %vm14 = vcmask 261120
    %v15 = vsel %vm14, %v12, -inf
    %16 = vmax.xlane.f32.xlu0 %v15
    %v17 = vpop.xlane.xlu0 %16
    %v18 = vlaneseq
    %v19 = vand.u32 %v18, 127
    %20 = vset.pattern.permute.xlu0 0
    %21 = vperm.xlu0 %20, %v13
    %v22 = vpop.permute.xlu0 %21
    %vm23 = vcmp.eq.s32.totalorder %v19, %v22
    %v24 = vsel %vm23, %v12, 0.0
    %v25 = vsel %vm14, %v24, 0.0
    %26 = vadd.xlane.f32.xlu0 %v25
    %v27 = vpop.xlane.xlu0 %26
    %v28 = vsub.f32 %v12, %v17
    %v29 = vmul.f32 %v28, 1.442695
    %v30 = vpow.pop %v29
    %v31 = vsel %vm14, %v30, 0.0
    %32 = vadd.xlane.f32.xlu0 %v31
    %v33 = vpop.xlane.xlu0 %32
    %v34 = vlog2.pop %v33
    %v35 = vmul.f32 %v34, 0.6931472
    %v36 = vadd.f32 %v35, %v17
    %v37 = vsub.f32 %v36, %v27
    %vm38 = vcmp.ge.s32.totalorder %v13, 0
    %v39 = vsel %vm38, %v37, 0.0
    %vm40 = vcmask 7168
    %v41 = vsel %vm40, %v39, 0.0
    %42 = vadd.xlane.f32.xlu0 %v41
    %v43 = vpop.xlane.xlu0 %42
    %v44 = vrot.slane %v43, 4
    %v45 = vadd.f32 %v43, %v44
    %v46 = vrot.slane %v45, 2
    %v47 = vadd.f32 %v45, %v46
    %v48 = vrot.slane %v47, 1
    %v49 = vadd.f32 %v47, %v48
    %s50 = vtos %v49
    %s51 = sadd.f32 %s50, 0.0
    %v52 = vstv %s51
    %53 = vst [vmem:[#allocation2] sm:$0x1] %v52
    // Predicated region
    $region10: #{tpu_custom_call.1} parent=1 // pred_check
      _
    $region11: #{tpu_custom_call.1} parent=1 // pred_check_branch
      %55 = sbr.rel (0) target = $region13
    $region12: #{tpu_custom_call.1} parent=1 // pred_region
      %57 = vsyncadd [#allocation3], 0
      %s59 = sshll.u32 [#allocation2], 4
      %s60 = int_to_ptr.vmem [resolvable:$true] %s59
      %s61 = sshll.u32 %s2, 4
      %s62 = int_to_ptr.hbm [resolvable:$true] %s61
      %64 = dma.vmem_to_hbm [thread:$0]  %s60, 16, %s62, [#allocation3]
    $region13: #{tpu_custom_call.1} parent=1 // pred_fallthru
      _
    // Predicated region
    $region14: #{tpu_custom_call.1} parent=1 // pred_check
      _
    $region15: #{tpu_custom_call.1} parent=1 // pred_check_branch
      %66 = sbr.rel (0) target = $region17
    $region16: #{tpu_custom_call.1} parent=1 // pred_region
      %68 = dma.done [#allocation3], 16
    $region17: #{tpu_custom_call.1} parent=1 // pred_fallthru
      _
    %69 = vsyncpa [#allocation3], 1

</llo_original>
